<compile_context>
chip_gen: v7x
topology: tpu7x:2x2x1
jax: 0.10.0
libtpu: 0.0.40
codegen_flags: <defaults>
</compile_context>

<pallas_src>
import jax
import jax.numpy as jnp
import numpy as np
from jax import lax
from jax.experimental import pallas as pl
from jax.experimental.pallas import tpu as pltpu


# ----------------------------- Pallas kernel ------------------------------ #
def _upsample_conv_kernel(x_ref, a_ref, m_ref, b_ref, o_ref, g_ref):
    # x_ref: (B_t, H, WCin_p)    bf16  original-resolution image rows
    # a_ref: (KH, THo, H)        bf16  one-hot row-selection constants
    # m_ref: (WCin_p, KH*CW_p)   bf16  taps x weights, concatenated over kh
    # b_ref: (1, CW_p)           f32   bias repeated along Wo (lane-padded)
    # o_ref: (B_t, THo, CW_p)    f32   output tile (lane-dense minor dim)
    # g_ref: (B_t*H, KH*CW_p)    bf16  VMEM scratch: G = x @ Mcat (cached)
    b_t, h = x_ref.shape[0], x_ref.shape[1]
    kh_taps = a_ref.shape[0]
    cw_p = o_ref.shape[2]

    # Recompute G only when the batch tile changes (row-tile grid axis is
    # 'arbitrary', so t == 0 is the first row tile of every batch tile).
    @pl.when(pl.program_id(1) == 0)
    def _():
        x = x_ref[...].reshape(b_t * h, x_ref.shape[2])           # (B_t*H, WCin_p)
        g = jnp.dot(x, m_ref[...], preferred_element_type=jnp.float32)
        g_ref[...] = g.astype(g_ref.dtype)                        # (B_t*H, KH*CW_p)

    bias = b_ref[...]                                             # (1, CW_p) f32
    for b in range(b_t):                                          # static
        acc = None
        for kh in range(kh_taps):                                 # static
            g_blk = g_ref[pl.ds(b * h, h), pl.ds(kh * cw_p, cw_p)]  # (H, CW_p) bf16
            p = jnp.dot(a_ref[kh], g_blk, preferred_element_type=jnp.float32)
            acc = p if acc is None else acc + p                   # (THo, CW_p) f32
        o_ref[b] = (acc + bias).astype(o_ref.dtype)


# ------------------------------ host helpers ------------------------------ #
def _round_up(v, m):
    return (v + m - 1) // m * m


def _vmem_cap_bytes():
    try:
        return int(pltpu.get_tpu_info().vmem_capacity_bytes)
    except Exception:
        return 64 * 1024 * 1024      # conservative default (v7x per-TC VMEM)


def _vmem_need_bytes(b_t, H, THo, WCin_p, KH, CW_p):
    bf2, f4 = 2, 4
    x_blk = b_t * H * WCin_p * bf2
    a_blk = KH * THo * H * bf2
    m_blk = WCin_p * KH * CW_p * bf2
    b_blk = CW_p * f4
    o_blk = b_t * THo * CW_p * f4
    g_scr = b_t * H * KH * CW_p * bf2
    # BlockSpec-managed inputs/outputs are double-buffered; scratch is single.
    return 2 * (x_blk + a_blk + m_blk + b_blk + o_blk) + g_scr


def _pick_batch_tile(n, H, target_rows=256):
    """Pack images per grid step to fill the MXU M dim, but keep >=2 steps on
    the 'parallel' batch axis when possible (megacore / 2-TC chips)."""
    bt = max(1, min(n, (target_rows + H - 1) // H))
    while n % bt:
        bt -= 1
    if bt == n and n >= 2:
        bt = n // 2
        while n % bt:
            bt -= 1
    return bt


def _pick_row_tile(Ho, need_fn, budget):
    cands = [Ho] + [t for t in (1024, 512, 256, 128, 64, 32, 16, 8)
                    if t < Ho and Ho % t == 0]
    for t in cands:
        if need_fn(t) <= budget:
            return t
    return None


_CONST_CACHE = {}


def _build_selection_constants(weight, bias, H, W, kernel_size, stride, upsample):
    """Fold upsample + reflection pad + stride + conv weights into A / Mcat / bias."""
    w_np = np.asarray(weight, np.float32)
    b_np = np.asarray(bias, np.float32)
    cout, cin, KH, KW = w_np.shape
    key = (w_np.tobytes(), b_np.tobytes(), H, W,
           int(kernel_size), int(stride), int(upsample or 0))
    hit = _CONST_CACHE.get(key)
    if hit is not None:
        return hit

    u = int(upsample) if upsample else 1
    pad = kernel_size // 2
    Hu, Wu = H * u, W * u
    Hp, Wp = Hu + 2 * pad, Wu + 2 * pad
    Ho = (Hp - KH) // stride + 1
    Wo = (Wp - KW) // stride + 1
    assert pad < Hu and pad < Wu, "reflection pad wider than (upsampled) input"

    def refl(idx, L):     # ReflectionPad2d semantics (no edge repeat), vectorized
        i = np.abs(idx)
        return np.where(i >= L, 2 * L - 2 - i, i)

    # padded+upsampled index -> original-resolution index
    rmap = refl(np.arange(Hp) - pad, Hu) // u                         # (Hp,)
    cmap = refl(np.arange(Wp) - pad, Wu) // u                         # (Wp,)

    # A[kh, ho, h] = [h == source row of output row ho for tap kh]
    rsel = rmap[stride * np.arange(Ho)[:, None] + np.arange(KH)[None, :]]   # (Ho,KH)
    A = (np.arange(H)[None, None, :] == rsel.T[:, :, None]).astype(np.float32)

    # S[kw, w, wo] = [w == source column of output column wo for tap kw]
    csel = cmap[stride * np.arange(Wo)[None, :] + np.arange(KW)[:, None]]   # (KW,Wo)
    S = (np.arange(W)[None, :, None] == csel[:, None, :]).astype(np.float32)

    # M[kh, w*Cin+ci, co*Wo+wo] = sum_kw W[co,ci,kh,kw] * S[kw, w, wo]
    M = np.einsum('xwv,oihx->hwiov', S, w_np).reshape(KH, W * cin, cout * Wo)

    WCin, CW = W * cin, cout * Wo
    WCin_p, CW_p = _round_up(WCin, 128), _round_up(CW, 128)

    Mcat = np.zeros((WCin_p, KH * CW_p), np.float32)
    for kh in range(KH):
        Mcat[:WCin, kh * CW_p:kh * CW_p + CW] = M[kh]

    b_rep = np.zeros((1, CW_p), np.float32)
    b_rep[0, :CW] = np.repeat(b_np, Wo)

    out = (jnp.asarray(A, dtype=jnp.bfloat16),        # exact: entries are 0/1
           jnp.asarray(Mcat, dtype=jnp.bfloat16),
           jnp.asarray(b_rep),
           Ho, Wo, CW, CW_p, WCin, WCin_p, KH)
    _CONST_CACHE[key] = out
    return out


def _xla_fallback(x, weight, bias, *, kernel_size, stride, upsample=None):
    """Plain XLA path mirroring the PyTorch forward (also numerical reference)."""
    if upsample:
        x = jnp.repeat(jnp.repeat(x, upsample, axis=2), upsample, axis=3)
    pad = kernel_size // 2
    if pad > 0:
        x = jnp.pad(x, ((0, 0), (0, 0), (pad, pad), (pad, pad)), mode="reflect")
    out = lax.conv_general_dilated(
        x, weight, window_strides=(stride, stride), padding="VALID",
        dimension_numbers=("NCHW", "OIHW", "NCHW"))
    return out + bias[None, :, None, None]


# -------------------------------- wrapper ---------------------------------- #
def upsample_conv_layer(x, weight, bias, *, kernel_size, stride, upsample=None):
    """x: (N, Cin, H, W) f32 NCHW. weight: (Cout, Cin, KH, KW). bias: (Cout,)."""
    n, cin, H, W = x.shape
    cout = weight.shape[0]

    (A, Mcat, b_rep, Ho, Wo, CW, CW_p,
     WCin, WCin_p, KH) = _build_selection_constants(
        weight, bias, H, W, kernel_size, stride, upsample)

    cap = _vmem_cap_bytes()
    budget = int(0.7 * cap)

    b_t = _pick_batch_tile(n, H)
    THo = None
    while b_t >= 1:
        THo = _pick_row_tile(
            Ho, lambda t: _vmem_need_bytes(b_t, H, t, WCin_p, KH, CW_p), budget)
        if THo is not None:
            break
        b_t = 1 if b_t > 1 else 0
    if not THo:
        # Fused constants too large for VMEM at this shape -> standard conv path.
        return _xla_fallback(x, weight, bias, kernel_size=kernel_size,
                             stride=stride, upsample=upsample)

    need = _vmem_need_bytes(b_t, H, THo, WCin_p, KH, CW_p)
    vmem_limit = int(min(0.9 * cap, max(2 * need, 32 * 1024 * 1024)))

    # Original-resolution input as (N, H, WCin_p): rows = H, lanes = (w, ci),
    # lane dim zero-padded to a multiple of 128, bf16 for the MXU.
    x2 = jnp.transpose(x, (0, 2, 3, 1)).reshape(n, H, WCin)
    if WCin_p != WCin:
        x2 = jnp.pad(x2, ((0, 0), (0, 0), (0, WCin_p - WCin)))
    x2 = x2.astype(jnp.bfloat16)

    grid = (n // b_t, Ho // THo)
    out2 = pl.pallas_call(
        _upsample_conv_kernel,
        out_shape=jax.ShapeDtypeStruct((n, Ho, CW_p), jnp.float32),
        grid=grid,
        in_specs=[
            pl.BlockSpec((b_t, H, WCin_p), lambda i, t: (i, 0, 0)),
            pl.BlockSpec((KH, THo, H), lambda i, t: (0, t, 0)),
            pl.BlockSpec((WCin_p, KH * CW_p), lambda i, t: (0, 0)),
            pl.BlockSpec((1, CW_p), lambda i, t: (0, 0)),
        ],
        out_specs=pl.BlockSpec((b_t, THo, CW_p), lambda i, t: (i, t, 0)),
        scratch_shapes=[pltpu.VMEM((b_t * H, KH * CW_p), jnp.bfloat16)],
        compiler_params=pltpu.CompilerParams(
            # Batch axis 'parallel' (megacore / 2 TCs); row-tile axis must be
            # 'arbitrary' because the cached G scratch is carried across it.
            dimension_semantics=("parallel", "arbitrary"),
            vmem_limit_bytes=vmem_limit,
        ),
    )(x2, A, Mcat, b_rep)

    # (N, Ho, CW_p) -> strip lane padding -> NCHW (cheap permute of the small
    # output only; the upsampled/padded tensor never exists in HBM).
    if CW_p != CW:
        out2 = out2[:, :, :CW]
    return out2.reshape(n, Ho, cout, Wo).transpose(0, 2, 1, 3)


# --------------------------------- test ------------------------------------ #
if __name__ == "__main__":
    # UpsampleConvLayer(in_channels=4, out_channels=8, kernel_size=3, stride=1, upsample=2)
    in_channels, out_channels, kernel_size, stride, upsample = 4, 8, 3, 1, 2

    key = jax.random.PRNGKey(0)
    kx, kw, kb = jax.random.split(key, 3)
    x = jax.random.normal(kx, (2, in_channels, 16, 16), dtype=jnp.float32)
    weight = jax.random.normal(
        kw, (out_channels, in_channels, kernel_size, kernel_size),
        dtype=jnp.float32) * 0.1
    bias = jax.random.normal(kb, (out_channels,), dtype=jnp.float32) * 0.1

    out = upsample_conv_layer(
        x, weight, bias,
        kernel_size=kernel_size, stride=stride, upsample=upsample)
    out = jax.block_until_ready(out)

    ref = _xla_fallback(
        x, weight, bias,
        kernel_size=kernel_size, stride=stride, upsample=upsample)
    ref = jax.block_until_ready(ref)

    assert out.shape == (2, out_channels, 32, 32), out.shape
    # bf16 MXU operands with f32 accumulation (per perf review) -> compare
    # against the f32 reference at a bf16-appropriate tolerance.
    max_err = float(jnp.max(jnp.abs(out - ref)))
    assert jnp.allclose(out, ref, atol=3e-2, rtol=3e-2), max_err

    print("KERNEL_OK")
</pallas_src>

<mosaic_0001>
module attributes {stable_mosaic.version = 11 : i64} {
  func.func @_upsample_conv_kernel(%arg0: i32, %arg1: i32, %arg2: memref<1x16x128xbf16, #tpu.memory_space<vmem>>, %arg3: memref<3x32x16xbf16, #tpu.memory_space<vmem>>, %arg4: memref<128x768xbf16, #tpu.memory_space<vmem>>, %arg5: memref<1x256xf32, #tpu.memory_space<vmem>>, %arg6: memref<1x32x256xf32, #tpu.memory_space<vmem>>, %arg7: memref<16x768xbf16, #tpu.memory_space<vmem>>) attributes {dimension_semantics = [#tpu.dimension_semantics<parallel>, #tpu.dimension_semantics<arbitrary>], iteration_bounds = array<i64: 2, 1>, scalar_prefetch = 0 : i64, scratch_operands = 1 : i64, tpu.core_type = #tpu.core_type<tc>, window_params = [{transform_indices = @transform_0, window_bounds = array<i64: 1, 16, 128>}, {transform_indices = @transform_1, window_bounds = array<i64: 3, 32, 16>}, {pipeline_mode = #tpu.pipeline_mode<synchronous>, transform_indices = @transform_2, window_bounds = array<i64: 128, 768>}, {pipeline_mode = #tpu.pipeline_mode<synchronous>, transform_indices = @transform_3, window_bounds = array<i64: 1, 256>}, {transform_indices = @transform_4, window_bounds = array<i64: 1, 32, 256>}]} {
    %c0_i32 = arith.constant 0 : i32
    %0 = arith.cmpi eq, %arg1, %c0_i32 : i32
    %1 = arith.extui %0 : i1 to i32
    %c0_i32_0 = arith.constant 0 : i32
    %2 = arith.cmpi ne, %1, %c0_i32_0 : i32
    scf.if %2 {
      %c0_18 = arith.constant 0 : index
      %c0_19 = arith.constant 0 : index
      %c0_20 = arith.constant 0 : index
      %23 = vector.load %arg2[%c0_18, %c0_19, %c0_20] : memref<1x16x128xbf16, #tpu.memory_space<vmem>>, vector<1x16x128xbf16>
      %24 = vector.shape_cast %23 : vector<1x16x128xbf16> to vector<16x128xbf16>
      %c0_21 = arith.constant 0 : index
      %c0_22 = arith.constant 0 : index
      %25 = vector.load %arg4[%c0_21, %c0_22] : memref<128x768xbf16, #tpu.memory_space<vmem>>, vector<128x768xbf16>
      %cst_23 = arith.constant dense<0.000000e+00> : vector<16x768xf32>
      %26 = tpu.matmul %24, %25, %cst_23 {dimension_numbers = #tpu.dot_dimension_numbers<[1], [0], [0], [1], [0, 0, 1, 1], [], []>} : vector<16x128xbf16>, vector<128x768xbf16>, vector<16x768xf32> -> vector<16x768xf32>
      %27 = arith.truncf %26 : vector<16x768xf32> to vector<16x768xbf16>
      %c0_24 = arith.constant 0 : index
      %c0_25 = arith.constant 0 : index
      %28 = vector.load %arg7[%c0_24, %c0_25] : memref<16x768xbf16, #tpu.memory_space<vmem>>, vector<16x768xbf16>
      tpu.vector_store %arg7[%c0_24, %c0_25], %27 {strides = array<i32>} : memref<16x768xbf16, #tpu.memory_space<vmem>>, vector<16x768xbf16>,
    } else {
    }
    %c0 = arith.constant 0 : index
    %c0_1 = arith.constant 0 : index
    %3 = vector.load %arg5[%c0, %c0_1] : memref<1x256xf32, #tpu.memory_space<vmem>>, vector<1x256xf32>
    %c0_2 = arith.constant 0 : index
    %c0_3 = arith.constant 0 : index
    %4 = vector.load %arg7[%c0_2, %c0_3] : memref<16x768xbf16, #tpu.memory_space<vmem>>, vector<16x256xbf16>
    %c0_4 = arith.constant 0 : index
    %c0_5 = arith.constant 0 : index
    %c0_6 = arith.constant 0 : index
    %5 = vector.load %arg3[%c0_4, %c0_5, %c0_6] : memref<3x32x16xbf16, #tpu.memory_space<vmem>>, vector<1x32x16xbf16>
    %6 = vector.shape_cast %5 : vector<1x32x16xbf16> to vector<32x16xbf16>
    %cst = arith.constant dense<0.000000e+00> : vector<32x256xf32>
    %7 = tpu.matmul %6, %4, %cst {dimension_numbers = #tpu.dot_dimension_numbers<[1], [0], [0], [1], [0, 0, 1, 1], [], []>} : vector<32x16xbf16>, vector<16x256xbf16>, vector<32x256xf32> -> vector<32x256xf32>
    %c0_7 = arith.constant 0 : index
    %c256 = arith.constant 256 : index
    %8 = vector.load %arg7[%c0_7, %c256] : memref<16x768xbf16, #tpu.memory_space<vmem>>, vector<16x256xbf16>
    %c1 = arith.constant 1 : index
    %c0_8 = arith.constant 0 : index
    %c0_9 = arith.constant 0 : index
    %9 = vector.load %arg3[%c1, %c0_8, %c0_9] : memref<3x32x16xbf16, #tpu.memory_space<vmem>>, vector<1x32x16xbf16>
    %10 = vector.shape_cast %9 : vector<1x32x16xbf16> to vector<32x16xbf16>
    %cst_10 = arith.constant dense<0.000000e+00> : vector<32x256xf32>
    %11 = tpu.matmul %10, %8, %cst_10 {dimension_numbers = #tpu.dot_dimension_numbers<[1], [0], [0], [1], [0, 0, 1, 1], [], []>} : vector<32x16xbf16>, vector<16x256xbf16>, vector<32x256xf32> -> vector<32x256xf32>
    %12 = arith.addf %7, %11 : vector<32x256xf32>
    %c0_11 = arith.constant 0 : index
    %c512 = arith.constant 512 : index
    %13 = vector.load %arg7[%c0_11, %c512] : memref<16x768xbf16, #tpu.memory_space<vmem>>, vector<16x256xbf16>
    %c2 = arith.constant 2 : index
    %c0_12 = arith.constant 0 : index
    %c0_13 = arith.constant 0 : index
    %14 = vector.load %arg3[%c2, %c0_12, %c0_13] : memref<3x32x16xbf16, #tpu.memory_space<vmem>>, vector<1x32x16xbf16>
    %15 = vector.shape_cast %14 : vector<1x32x16xbf16> to vector<32x16xbf16>
    %cst_14 = arith.constant dense<0.000000e+00> : vector<32x256xf32>
    %16 = tpu.matmul %15, %13, %cst_14 {dimension_numbers = #tpu.dot_dimension_numbers<[1], [0], [0], [1], [0, 0, 1, 1], [], []>} : vector<32x16xbf16>, vector<16x256xbf16>, vector<32x256xf32> -> vector<32x256xf32>
    %17 = arith.addf %12, %16 : vector<32x256xf32>
    %18 = vector.broadcast %3 : vector<1x256xf32> to vector<32x256xf32>
    %19 = arith.addf %17, %18 : vector<32x256xf32>
    %c0_15 = arith.constant 0 : index
    %c0_16 = arith.constant 0 : index
    %c0_17 = arith.constant 0 : index
    %20 = vector.load %arg6[%c0_15, %c0_16, %c0_17] : memref<1x32x256xf32, #tpu.memory_space<vmem>>, vector<1x32x256xf32>
    %21 = vector.shape_cast %20 : vector<1x32x256xf32> to vector<32x256xf32>
    %22 = vector.shape_cast %19 : vector<32x256xf32> to vector<1x32x256xf32>
    tpu.vector_store %arg6[%c0_15, %c0_16, %c0_17], %22 {strides = array<i32>} : memref<1x32x256xf32, #tpu.memory_space<vmem>>, vector<1x32x256xf32>,
    return
  }
  func.func @transform_0(%arg0: i32, %arg1: i32) -> (i32, i32, i32) {
    %c0_i32 = arith.constant 0 : i32
    %c0_i32_0 = arith.constant 0 : i32
    %c0_i32_1 = arith.constant 0 : i32
    return %arg0, %c0_i32, %c0_i32_0 : i32, i32, i32
  }
  func.func @transform_1(%arg0: i32, %arg1: i32) -> (i32, i32, i32) {
    %c0_i32 = arith.constant 0 : i32
    %c0_i32_0 = arith.constant 0 : i32
    %c0_i32_1 = arith.constant 0 : i32
    return %c0_i32, %arg1, %c0_i32_0 : i32, i32, i32
  }
  func.func @transform_2(%arg0: i32, %arg1: i32) -> (i32, i32) {
    %c0_i32 = arith.constant 0 : i32
    %c0_i32_0 = arith.constant 0 : i32
    %c0_i32_1 = arith.constant 0 : i32
    return %c0_i32, %c0_i32_0 : i32, i32
  }
  func.func @transform_3(%arg0: i32, %arg1: i32) -> (i32, i32) {
    %c0_i32 = arith.constant 0 : i32
    %c0_i32_0 = arith.constant 0 : i32
    %c0_i32_1 = arith.constant 0 : i32
    return %c0_i32, %c0_i32_0 : i32, i32
  }
  func.func @transform_4(%arg0: i32, %arg1: i32) -> (i32, i32, i32) {
    %c0_i32 = arith.constant 0 : i32
    %c0_i32_0 = arith.constant 0 : i32
    return %arg0, %arg1, %c0_i32 : i32, i32, i32
  }
}

</mosaic_0001>

<llo_original>
// kernel: tpu_custom_call.1
$region0: #{tpu_custom_call.1}
  #allocation0 [shape = 'u32[]', space=smem, size = 0x4, offset = 0x4, fixed_abs, tag = 'smem constant byte address 0x4 - core index']
  #allocation1 [shape = 'u32[144,128]{1,0:T(1,128)}', space=vmem, size = 0x12000, scoped, tag = 'internal scratch']
  #allocation2 [shape = 'bf16[16,768]{1,0:T(16,128)(2,1)}', space=vmem, size = 0x6000, scoped, tag = 'scratch operand']
  %s0 = inlined_call_operand.vmem [shape: bf16[2,16,128], index: 0, kind: input, shape index: {}]
  %s1 = inlined_call_operand.vmem [shape: bf16[3,32,16], index: 1, kind: input, shape index: {}]
  %s2 = inlined_call_operand.hbm [shape: bf16[128,768], index: 2, kind: input, shape index: {}]
  %s3 = inlined_call_operand.vmem [shape: f32[1,256], index: 3, kind: input, shape index: {}]
  %s4 = inlined_call_operand.hbm [shape: f32[2,32,256], index: 4, kind: output, shape index: {}]
  %s5 = sld [smem:[#allocation0]]
  $region57: #{tpu_custom_call.1} parent=0
    _
  %s7 = ssub.s32 1, %s5
  %s8 = scalar_select 0, %s7, %s5
  $region1: #{tpu_custom_call.1} parent=0
    #allocation3 [shape = 'u8[196608]{0}', space=vmem, size = 0x30000, scoped, tag = 'input window, operand 2, single buffered']
    #allocation4 [shape = 's32[2]{0}', space=sflag, size = 0x8, scoped, tag = 'scoped memory for tpu_custom_call.1']
    #allocation5 [shape = 's32[2]{0}', space=sflag, size = 0x8, scoped, tag = 'scoped memory for tpu_custom_call.1']
    #allocation6 [shape = 'u8[65536]{0}', space=vmem, size = 0x10000, scoped, tag = 'output window, operand 0']
    %9 = vsyncpa [#allocation4], 0
    %10 = vsyncpa [#allocation5], 0
    %s11 = scalar_lea.sflag [#allocation5], 1
    %12 = vsyncpa %s11, 0
    loop: start=0, step=1, limit=4
    $region2: #{tpu_custom_call.1} parent=1 // loop_pre_header
      _
    $region3: #{tpu_custom_call.1} parent=1 // loop_header
      %s14 = sphi 0, %s18
      %p15 = scmp.ge.s32.totalorder %s14, 4
      %s21 = sphi 0, %s33
      %s22 = sphi 0, %s29
      %s23 = sphi 0, %s21
      %s24 = sphi 0, %s22
      %s25 = sphi 0, %s23
      %s26 = sphi 0, %s24
      %s36 = sphi 0, %s38
      %s39 = sphi 0, %s36
      %s40 = sphi 0, %s39
      %s56 = sphi 0, %s40
      %s62 = sphi 0, %s64
      %s65 = sphi 0, %s62
      %s66 = sphi 0, %s65
      %s82 = sphi 0, %s66
      %s86 = sphi 0, %s86
      %s88 = sphi 0, %s86
      %s89 = sphi 0, %s88
      %s103 = sphi 0, %s89
      %s107 = sphi 0, %s107
      %s109 = sphi 0, %s107
      %s110 = sphi 0, %s109
      %s124 = sphi 0, %s110
      %s132 = sphi 0, %s134
      %s135 = sphi 0, %s132
      %s136 = sphi 0, %s135
      %s152 = sphi 0, %s136
    $region4: #{tpu_custom_call.1} parent=1 // loop_header_branch
      %17 = sbr.rel (%p15) target = $region8
    $region5: #{tpu_custom_call.1} parent=1 // loop_body
      %s19 = ssub.s32 %s14, 1
      %s20 = ssub.s32 %s14, 2
      %s27 = sadd.s32 1, %s22
      %p28 = scmp.ge.s32.totalorder %s27, 1
      %s29 = scalar_select %p28, 0, %s27
      %s30 = sadd.s32 1, %s21
      %s31 = scalar_select %p28, %s30, %s21
      %p32 = scmp.ge.s32.totalorder %s31, 2
      %s33 = scalar_select %p32, 0, %s31
      %s34 = ssub.s32 %s21, %s33
      %p35 = scmp.eq.s32.totalorder %s34, 0
      %s37 = sadd.s32 %s36, 1
      %s38 = scalar_select %p35, %s36, %s37
      %p41 = pneg %p35
      %p42 = scmp.eq.s32.totalorder %s14, 1
      %p43 = por %p41, %p42
      %p44 = scmp.ne.s32.totalorder %s36, %s39
      %p45 = scmp.eq.s32.totalorder %s14, 0
      %p46 = por %p44, %p45
      %p47 = scmp.ne.s32.totalorder %s36, %s39
      %p48 = scmp.eq.s32.totalorder %s19, 1
      %p49 = por %p47, %p48
      %p50 = scmp.ne.s32.totalorder %s39, %s40
      %p51 = scmp.eq.s32.totalorder %s19, 0
      %p52 = por %p50, %p51
      %p53 = scmp.ne.s32.totalorder %s39, %s40
      %p54 = scmp.eq.s32.totalorder %s20, 1
      %p55 = por %p53, %p54
      %p57 = scmp.ne.s32.totalorder %s40, %s56
      %p58 = scmp.eq.s32.totalorder %s20, 0
      %p59 = por %p57, %p58
      %s60 = ssub.s32 %s22, %s29
      %p61 = scmp.eq.s32.totalorder %s60, 0
      %s63 = sadd.s32 %s62, 1
      %s64 = scalar_select %p61, %s62, %s63
      %p67 = pneg %p61
      %p68 = scmp.eq.s32.totalorder %s14, 1
      %p69 = por %p67, %p68
      %p70 = scmp.ne.s32.totalorder %s62, %s65
      %p71 = scmp.eq.s32.totalorder %s14, 0
      %p72 = por %p70, %p71
      %p73 = scmp.ne.s32.totalorder %s62, %s65
      %p74 = scmp.eq.s32.totalorder %s19, 1
      %p75 = por %p73, %p74
      %p76 = scmp.ne.s32.totalorder %s65, %s66
      %p77 = scmp.eq.s32.totalorder %s19, 0
      %p78 = por %p76, %p77
      %p79 = scmp.ne.s32.totalorder %s65, %s66
      %p80 = scmp.eq.s32.totalorder %s20, 1
      %p81 = por %p79, %p80
      %p83 = scmp.ne.s32.totalorder %s66, %s82
      %p84 = scmp.eq.s32.totalorder %s20, 0
      %p85 = por %p83, %p84
      %s87 = sadd.s32 %s86, 1
      %p90 = scmp.eq.s32.totalorder %s14, 1
      %p91 = scmp.ne.s32.totalorder %s86, %s88
      %p92 = scmp.eq.s32.totalorder %s14, 0
      %p93 = por %p91, %p92
      %p94 = scmp.ne.s32.totalorder %s86, %s88
      %p95 = scmp.eq.s32.totalorder %s19, 1
      %p96 = por %p94, %p95
      %p97 = scmp.ne.s32.totalorder %s88, %s89
      %p98 = scmp.eq.s32.totalorder %s19, 0
      %p99 = por %p97, %p98
      %p100 = scmp.ne.s32.totalorder %s88, %s89
      %p101 = scmp.eq.s32.totalorder %s20, 1
      %p102 = por %p100, %p101
      %p104 = scmp.ne.s32.totalorder %s89, %s103
      %p105 = scmp.eq.s32.totalorder %s20, 0
      %p106 = por %p104, %p105
      %s108 = sadd.s32 %s107, 1
      %p111 = scmp.eq.s32.totalorder %s14, 1
      %p112 = scmp.ne.s32.totalorder %s107, %s109
      %p113 = scmp.eq.s32.totalorder %s14, 0
      %p114 = por %p112, %p113
      %p115 = scmp.ne.s32.totalorder %s107, %s109
      %p116 = scmp.eq.s32.totalorder %s19, 1
      %p117 = por %p115, %p116
      %p118 = scmp.ne.s32.totalorder %s109, %s110
      %p119 = scmp.eq.s32.totalorder %s19, 0
      %p120 = por %p118, %p119
      %p121 = scmp.ne.s32.totalorder %s109, %s110
      %p122 = scmp.eq.s32.totalorder %s20, 1
      %p123 = por %p121, %p122
      %p125 = scmp.ne.s32.totalorder %s110, %s124
      %p126 = scmp.eq.s32.totalorder %s20, 0
      %p127 = por %p125, %p126
      %s128 = ssub.s32 %s21, %s33
      %s129 = ssub.s32 %s22, %s29
      %s130 = sor.u32 %s128, %s129
      %p131 = scmp.eq.s32.totalorder %s130, 0
      %s133 = sadd.s32 %s132, 1
      %s134 = scalar_select %p131, %s132, %s133
      %p137 = pneg %p131
      %p138 = scmp.eq.s32.totalorder %s14, 1
      %p139 = por %p137, %p138
      %p140 = scmp.ne.s32.totalorder %s132, %s135
      %p141 = scmp.eq.s32.totalorder %s14, 0
      %p142 = por %p140, %p141
      %p143 = scmp.ne.s32.totalorder %s132, %s135
      %p144 = scmp.eq.s32.totalorder %s19, 1
      %p145 = por %p143, %p144
      %p146 = scmp.ne.s32.totalorder %s135, %s136
      %p147 = scmp.eq.s32.totalorder %s19, 0
      %p148 = por %p146, %p147
      %p149 = scmp.ne.s32.totalorder %s135, %s136
      %p150 = scmp.eq.s32.totalorder %s20, 1
      %p151 = por %p149, %p150
      %p153 = scmp.ne.s32.totalorder %s136, %s152
      %p154 = scmp.eq.s32.totalorder %s20, 0
      %p155 = por %p153, %p154
      %p156 = scmp.le.s32.totalorder 1, %s14
      %p157 = scmp.lt.s32.totalorder %s14, 3
      %p158 = pnand %p156, %p157
      %p159 = pneg %p158
      // Predicated region
      $region9: #{tpu_custom_call.1} parent=5 // pred_check
        _
      $region10: #{tpu_custom_call.1} parent=5 // pred_check_branch
        %161 = sbr.rel (%p158) target = $region12
      $region11: #{tpu_custom_call.1} parent=5 // pred_region
        %s162 = ssub.s32 %s14, 1
        // Predicated region
        $region13: #{tpu_custom_call.1} parent=11 // pred_check
          %p163 = pneg %p78
        $region14: #{tpu_custom_call.1} parent=11 // pred_check_branch
          %165 = sbr.rel (%p163) target = $region16
        $region15: #{tpu_custom_call.1} parent=11 // pred_region
          %s166 = smul.u32 4, %s24
          %p167 = scmp.lt.s32.totalorder %s166, 3
          %s168 = scalar_select %p167, %s166, 3
          %s169 = smul.addr %s168, 4
          %s170 = scalar_lea.vmem %s1, %s169
          %s171 = smul.u32 4, %s24
        $region16: #{tpu_custom_call.1} parent=11 // pred_fallthru
          _
        // Predicated region
        $region17: #{tpu_custom_call.1} parent=11 // pred_check
          %p172 = pneg %p99
        $region18: #{tpu_custom_call.1} parent=11 // pred_check_branch
          %174 = sbr.rel (%p172) target = $region20
        $region19: #{tpu_custom_call.1} parent=11 // pred_region
          %s176 = ssub.s32 6144, 6144
          %177 = vsyncadd [#allocation4], %s176
          %s178 = sshll.u32 [#allocation3], 4
          %s179 = int_to_ptr.vmem [resolvable:$true] %s178
          %184 = dma.hbm_to_vmem [thread:$0]  %s2, 6144, %s179, [#allocation4], 384, 384, 24
        $region20: #{tpu_custom_call.1} parent=11 // pred_fallthru
          _
        // Predicated region
        $region21: #{tpu_custom_call.1} parent=11 // pred_check
          %p185 = pneg %p120
        $region22: #{tpu_custom_call.1} parent=11 // pred_check_branch
          %187 = sbr.rel (%p185) target = $region24
        $region23: #{tpu_custom_call.1} parent=11 // pred_region
          _
        $region24: #{tpu_custom_call.1} parent=11 // pred_fallthru
          _
      $region12: #{tpu_custom_call.1} parent=5 // pred_fallthru
        _
      %p188 = scmp.lt.s32.totalorder %s14, 2
      // Predicated region
      $region25: #{tpu_custom_call.1} parent=5 // pred_check
        %p189 = pneg %p188
      $region26: #{tpu_custom_call.1} parent=5 // pred_check_branch
        %191 = sbr.rel (%p189) target = $region28
      $region27: #{tpu_custom_call.1} parent=5 // pred_region
        // Predicated region
        $region29: #{tpu_custom_call.1} parent=27 // pred_check
          %p192 = pneg %p46
        $region30: #{tpu_custom_call.1} parent=27 // pred_check_branch
          %194 = sbr.rel (%p192) target = $region32
        $region31: #{tpu_custom_call.1} parent=27 // pred_region
          %p195 = scmp.lt.s32.totalorder %s21, 1
          %s196 = scalar_select %p195, %s21, 1
          %s197 = smul.addr %s196, 2
          %s198 = smul.addr %s197, 4
          %s199 = scalar_lea.vmem %s0, %s198
        $region32: #{tpu_custom_call.1} parent=27 // pred_fallthru
          _
      $region28: #{tpu_custom_call.1} parent=5 // pred_fallthru
        _
      %p200 = scmp.le.s32.totalorder 1, %s14
      %p201 = scmp.lt.s32.totalorder %s14, 3
      %p202 = pnand %p200, %p201
      %p203 = pneg %p202
      // Predicated region
      $region33: #{tpu_custom_call.1} parent=5 // pred_check
        _
      $region34: #{tpu_custom_call.1} parent=5 // pred_check_branch
        %205 = sbr.rel (%p202) target = $region36
      $region35: #{tpu_custom_call.1} parent=5 // pred_region
        %s206 = ssub.s32 %s14, 1
        // Predicated region
        $region37: #{tpu_custom_call.1} parent=35 // pred_check
          %p207 = pneg %p99
        $region38: #{tpu_custom_call.1} parent=35 // pred_check_branch
          %209 = sbr.rel (%p207) target = $region40
        $region39: #{tpu_custom_call.1} parent=35 // pred_region
          %210 = dma.done [#allocation4], 6144
        $region40: #{tpu_custom_call.1} parent=35 // pred_fallthru
          _
        %p211 = scmp.lt.s32.totalorder %s23, 1
        %s212 = scalar_select %p211, %s23, 1
        %s213 = smul.addr %s212, 2
        %s214 = smul.addr %s213, 4
        %s215 = scalar_lea.vmem %s0, %s214
        %p216 = pneg %p52
        %p217 = pneg %p49
        %s218 = smul.u32 4, %s24
        %p219 = scmp.lt.s32.totalorder %s218, 3
        %s220 = scalar_select %p219, %s218, 3
        %s221 = smul.addr %s220, 4
        %s222 = scalar_lea.vmem %s1, %s221
        %p223 = pneg %p78
        %p224 = pneg %p75
        %p225 = pneg %p99
        %p226 = pneg %p96
        %p227 = pneg %p120
        %p228 = pneg %p117
        %p229 = pneg %p148
        %p230 = pneg %p145
        %s231 = sand.u32 %s135, 1
        %s232 = scalar_lea.sflag [#allocation5], %s231
        %s233 = sand.u32 %s135, 1
        %s234 = smul.addr %s233, 64
        %s235 = scalar_lea.vmem [#allocation6], %s234
        %p236 = scmp.lt.s32.totalorder %s23, 1
        %s237 = scalar_select %p236, %s23, 1
        %s238 = smul.addr %s237, 2
        %s239 = smul.addr %s238, 4
        %s240 = scalar_lea.vmem %s0, %s239
        %s241 = smul.u32 4, %s24
        %p242 = scmp.lt.s32.totalorder %s241, 3
        %s243 = scalar_select %p242, %s241, 3
        %s244 = smul.addr %s243, 4
        %s245 = scalar_lea.vmem %s1, %s244
        %s246 = smul.u32 4, %s24
        %s247 = smul.u32 4, %s24
        %p249 = scmp.eq.s32.totalorder %s24, 0
        // Predicated region
        $region41: #{tpu_custom_call.1} parent=35 // pred_check
          %p250 = pneg %p249
        $region42: #{tpu_custom_call.1} parent=35 // pred_check_branch
          %252 = sbr.rel (%p250) target = $region44
        $region43: #{tpu_custom_call.1} parent=35 // pred_region
          %v253 = vld [vmem:[%s240] sm:$0xf]
          %v254 = vld [vmem:[%s240 + $0x4] sm:$0xf]
          %v255 = vld [vmem:[#allocation3] sm:$0xff]
          %v256 = vld [vmem:[#allocation3 + $0x8] sm:$0xff]
          %v257 = vld [vmem:[#allocation3 + $0x10] sm:$0xff]
          %v258 = vld [vmem:[#allocation3 + $0x18] sm:$0xff]
          %v259 = vld [vmem:[#allocation3 + $0x20] sm:$0xff]
          %v260 = vld [vmem:[#allocation3 + $0x28] sm:$0xff]
          %v261 = vld [vmem:[#allocation3 + $0x30] sm:$0xff]
          %v262 = vld [vmem:[#allocation3 + $0x38] sm:$0xff]
          %v263 = vld [vmem:[#allocation3 + $0x40] sm:$0xff]
          %v264 = vld [vmem:[#allocation3 + $0x48] sm:$0xff]
          %v265 = vld [vmem:[#allocation3 + $0x50] sm:$0xff]
          %v266 = vld [vmem:[#allocation3 + $0x58] sm:$0xff]
          %v267 = vld [vmem:[#allocation3 + $0x60] sm:$0xff]
          %v268 = vld [vmem:[#allocation3 + $0x68] sm:$0xff]
          %v269 = vld [vmem:[#allocation3 + $0x70] sm:$0xff]
          %v270 = vld [vmem:[#allocation3 + $0x78] sm:$0xff]
          %v271 = vld [vmem:[#allocation3 + $0x80] sm:$0xff]
          %v272 = vld [vmem:[#allocation3 + $0x88] sm:$0xff]
          %v273 = vld [vmem:[#allocation3 + $0x90] sm:$0xff]
          %v274 = vld [vmem:[#allocation3 + $0x98] sm:$0xff]
          %v275 = vld [vmem:[#allocation3 + $0xa0] sm:$0xff]
          %v276 = vld [vmem:[#allocation3 + $0xa8] sm:$0xff]
          %v277 = vld [vmem:[#allocation3 + $0xb0] sm:$0xff]
          %v278 = vld [vmem:[#allocation3 + $0xb8] sm:$0xff]
          %v279 = vld [vmem:[#allocation3 + $0xc0] sm:$0xff]
          %v280 = vld [vmem:[#allocation3 + $0xc8] sm:$0xff]
          %v281 = vld [vmem:[#allocation3 + $0xd0] sm:$0xff]
          %v282 = vld [vmem:[#allocation3 + $0xd8] sm:$0xff]
          %v283 = vld [vmem:[#allocation3 + $0xe0] sm:$0xff]
          %v284 = vld [vmem:[#allocation3 + $0xe8] sm:$0xff]
          %v285 = vld [vmem:[#allocation3 + $0xf0] sm:$0xff]
          %v286 = vld [vmem:[#allocation3 + $0xf8] sm:$0xff]
          %v287 = vld [vmem:[#allocation3 + $0x100] sm:$0xff]
          %v288 = vld [vmem:[#allocation3 + $0x108] sm:$0xff]
          %v289 = vld [vmem:[#allocation3 + $0x110] sm:$0xff]
          %v290 = vld [vmem:[#allocation3 + $0x118] sm:$0xff]
          %v291 = vld [vmem:[#allocation3 + $0x120] sm:$0xff]
          %v292 = vld [vmem:[#allocation3 + $0x128] sm:$0xff]
          %v293 = vld [vmem:[#allocation3 + $0x130] sm:$0xff]
          %v294 = vld [vmem:[#allocation3 + $0x138] sm:$0xff]
          %v295 = vld [vmem:[#allocation3 + $0x140] sm:$0xff]
          %v296 = vld [vmem:[#allocation3 + $0x148] sm:$0xff]
          %v297 = vld [vmem:[#allocation3 + $0x150] sm:$0xff]
          %v298 = vld [vmem:[#allocation3 + $0x158] sm:$0xff]
          %v299 = vld [vmem:[#allocation3 + $0x160] sm:$0xff]
          %v300 = vld [vmem:[#allocation3 + $0x168] sm:$0xff]
          %v301 = vld [vmem:[#allocation3 + $0x170] sm:$0xff]
          %v302 = vld [vmem:[#allocation3 + $0x178] sm:$0xff]
          %v305 = vunpack.c.l.b16 %v253
          %v306 = vunpack.c.l.b16 %v254
          %v307 = vpack.c.b16 %v306, %v305
          %v357 = vunpack.c.l.b16 %v255
          %v358 = vunpack.c.h.b16 %v255
          %v359 = vunpack.c.l.b16 %v256
          %v360 = vunpack.c.h.b16 %v256
          %v361 = vunpack.c.l.b16 %v257
          %v362 = vunpack.c.h.b16 %v257
          %v363 = vunpack.c.l.b16 %v258
          %v364 = vunpack.c.h.b16 %v258
          %v365 = vunpack.c.l.b16 %v259
          %v366 = vunpack.c.h.b16 %v259
          %v367 = vunpack.c.l.b16 %v260
          %v368 = vunpack.c.h.b16 %v260
          %v369 = vunpack.c.l.b16 %v261
          %v370 = vunpack.c.h.b16 %v261
          %v371 = vunpack.c.l.b16 %v262
          %v372 = vunpack.c.h.b16 %v262
          %v373 = vunpack.c.l.b16 %v263
          %v374 = vunpack.c.h.b16 %v263
          %v375 = vunpack.c.l.b16 %v264
          %v376 = vunpack.c.h.b16 %v264
          %v377 = vunpack.c.l.b16 %v265
          %v378 = vunpack.c.h.b16 %v265
          %v379 = vunpack.c.l.b16 %v266
          %v380 = vunpack.c.h.b16 %v266
          %v381 = vunpack.c.l.b16 %v267
          %v382 = vunpack.c.h.b16 %v267
          %v383 = vunpack.c.l.b16 %v268
          %v384 = vunpack.c.h.b16 %v268
          %v385 = vunpack.c.l.b16 %v269
          %v386 = vunpack.c.h.b16 %v269
          %v387 = vunpack.c.l.b16 %v270
          %v388 = vunpack.c.h.b16 %v270
          %v389 = vunpack.c.l.b16 %v271
          %v390 = vunpack.c.h.b16 %v271
          %v391 = vunpack.c.l.b16 %v272
          %v392 = vunpack.c.h.b16 %v272
          %v393 = vunpack.c.l.b16 %v273
          %v394 = vunpack.c.h.b16 %v273
          %v395 = vunpack.c.l.b16 %v274
          %v396 = vunpack.c.h.b16 %v274
          %v397 = vunpack.c.l.b16 %v275
          %v398 = vunpack.c.h.b16 %v275
          %v399 = vunpack.c.l.b16 %v276
          %v400 = vunpack.c.h.b16 %v276
          %v401 = vunpack.c.l.b16 %v277
          %v402 = vunpack.c.h.b16 %v277
          %v403 = vunpack.c.l.b16 %v278
          %v404 = vunpack.c.h.b16 %v278
          %v405 = vunpack.c.l.b16 %v279
          %v406 = vunpack.c.h.b16 %v279
          %v407 = vunpack.c.l.b16 %v280
          %v408 = vunpack.c.h.b16 %v280
          %v409 = vunpack.c.l.b16 %v281
          %v410 = vunpack.c.h.b16 %v281
          %v411 = vunpack.c.l.b16 %v282
          %v412 = vunpack.c.h.b16 %v282
          %v413 = vunpack.c.l.b16 %v283
          %v414 = vunpack.c.h.b16 %v283
          %v415 = vunpack.c.l.b16 %v284
          %v416 = vunpack.c.h.b16 %v284
          %v417 = vunpack.c.l.b16 %v285
          %v418 = vunpack.c.h.b16 %v285
          %v419 = vunpack.c.l.b16 %v286
          %v420 = vunpack.c.h.b16 %v286
          %v421 = vunpack.c.l.b16 %v287
          %v422 = vunpack.c.h.b16 %v287
          %v423 = vunpack.c.l.b16 %v288
          %v424 = vunpack.c.h.b16 %v288
          %v425 = vunpack.c.l.b16 %v289
          %v426 = vunpack.c.h.b16 %v289
          %v427 = vunpack.c.l.b16 %v290
          %v428 = vunpack.c.h.b16 %v290
          %v429 = vunpack.c.l.b16 %v291
          %v430 = vunpack.c.h.b16 %v291
          %v431 = vunpack.c.l.b16 %v292
          %v432 = vunpack.c.h.b16 %v292
          %v433 = vunpack.c.l.b16 %v293
          %v434 = vunpack.c.h.b16 %v293
          %v435 = vunpack.c.l.b16 %v294
          %v436 = vunpack.c.h.b16 %v294
          %v437 = vunpack.c.l.b16 %v295
          %v438 = vunpack.c.h.b16 %v295
          %v439 = vunpack.c.l.b16 %v296
          %v440 = vunpack.c.h.b16 %v296
          %v441 = vunpack.c.l.b16 %v297
          %v442 = vunpack.c.h.b16 %v297
          %v443 = vunpack.c.l.b16 %v298
          %v444 = vunpack.c.h.b16 %v298
          %v445 = vunpack.c.l.b16 %v299
          %v446 = vunpack.c.h.b16 %v299
          %v447 = vunpack.c.l.b16 %v300
          %v448 = vunpack.c.h.b16 %v300
          %v449 = vunpack.c.l.b16 %v301
          %v450 = vunpack.c.h.b16 %v301
          %v451 = vunpack.c.l.b16 %v302
          %v452 = vunpack.c.h.b16 %v302
          %v453 = vpack.c.b16 %v363, %v357
          %v454 = vpack.c.b16 %v364, %v358
          %v455 = vpack.c.b16 %v365, %v359
          %v456 = vpack.c.b16 %v366, %v360
          %v457 = vpack.c.b16 %v367, %v361
          %v458 = vpack.c.b16 %v368, %v362
          %v459 = vpack.c.b16 %v375, %v369
          %v460 = vpack.c.b16 %v376, %v370
          %v461 = vpack.c.b16 %v377, %v371
          %v462 = vpack.c.b16 %v378, %v372
          %v463 = vpack.c.b16 %v379, %v373
          %v464 = vpack.c.b16 %v380, %v374
          %v465 = vpack.c.b16 %v387, %v381
          %v466 = vpack.c.b16 %v388, %v382
          %v467 = vpack.c.b16 %v389, %v383
          %v468 = vpack.c.b16 %v390, %v384
          %v469 = vpack.c.b16 %v391, %v385
          %v470 = vpack.c.b16 %v392, %v386
          %v471 = vpack.c.b16 %v399, %v393
          %v472 = vpack.c.b16 %v400, %v394
          %v473 = vpack.c.b16 %v401, %v395
          %v474 = vpack.c.b16 %v402, %v396
          %v475 = vpack.c.b16 %v403, %v397
          %v476 = vpack.c.b16 %v404, %v398
          %v477 = vpack.c.b16 %v411, %v405
          %v478 = vpack.c.b16 %v412, %v406
          %v479 = vpack.c.b16 %v413, %v407
          %v480 = vpack.c.b16 %v414, %v408
          %v481 = vpack.c.b16 %v415, %v409
          %v482 = vpack.c.b16 %v416, %v410
          %v483 = vpack.c.b16 %v423, %v417
          %v484 = vpack.c.b16 %v424, %v418
          %v485 = vpack.c.b16 %v425, %v419
          %v486 = vpack.c.b16 %v426, %v420
          %v487 = vpack.c.b16 %v427, %v421
          %v488 = vpack.c.b16 %v428, %v422
          %v489 = vpack.c.b16 %v435, %v429
          %v490 = vpack.c.b16 %v436, %v430
          %v491 = vpack.c.b16 %v437, %v431
          %v492 = vpack.c.b16 %v438, %v432
          %v493 = vpack.c.b16 %v439, %v433
          %v494 = vpack.c.b16 %v440, %v434
          %v495 = vpack.c.b16 %v447, %v441
          %v496 = vpack.c.b16 %v448, %v442
          %v497 = vpack.c.b16 %v449, %v443
          %v498 = vpack.c.b16 %v450, %v444
          %v499 = vpack.c.b16 %v451, %v445
          %v500 = vpack.c.b16 %v452, %v446
          %549 = vmatprep.subr.bf16.mxu0 %v454
          %550 = vmatpush1.bf16.msra.mxu0 %v453
          %551 = vmatprep.subr.bf16.mxu0 %v460
          %552 = vmatpush1.bf16.msra.mxu0 %v459
          %553 = vmatprep.subr.bf16.mxu0 %v466
          %554 = vmatpush1.bf16.msra.mxu0 %v465
          %555 = vmatprep.subr.bf16.mxu0 %v472
          %556 = vmatpush1.bf16.msra.mxu0 %v471
          %557 = vmatprep.subr.bf16.mxu0 %v478
          %558 = vmatpush1.bf16.msra.mxu0 %v477
          %559 = vmatprep.subr.bf16.mxu0 %v484
          %560 = vmatpush1.bf16.msra.mxu0 %v483
          %561 = vmatprep.subr.bf16.mxu0 %v490
          %562 = vmatpush1.bf16.msra.mxu0 %v489
          %563 = vmatprep.subr.bf16.mxu0 %v496
          %564 = vmatpush1.bf16.msra.mxu0 %v495
          %565 = vmatprep.subr.bf16.mxu0 0
          %566 = vmatpush1.bf16.msra.mxu0 0
          %567 = vmatprep.subr.bf16.mxu0 0
          %568 = vmatpush1.bf16.msra.mxu0 0
          %569 = vmatprep.subr.bf16.mxu0 0
          %570 = vmatpush1.bf16.msra.mxu0 0
          %571 = vmatprep.subr.bf16.mxu0 0
          %572 = vmatpush1.bf16.msra.mxu0 0
          %573 = vmatprep.subr.bf16.mxu0 0
          %574 = vmatpush1.bf16.msra.mxu0 0
          %575 = vmatprep.subr.bf16.mxu0 0
          %576 = vmatpush1.bf16.msra.mxu0 0
          %577 = vmatprep.subr.bf16.mxu0 0
          %578 = vmatpush1.bf16.msra.mxu0 0
          %579 = vmatprep.subr.bf16.mxu0 0
          %580 = vmatpush1.bf16.msra.mxu0 0
          %581 = vmatprep.mubr.bf16.mxu0 0
          %582 = vmatmul.mubr.bf16.gmra.mrb[0].mxu0 %v307
          %v583 = vpop.f32.mrb[0].mxu0
          %v584 = vadd.f32 0.0, %v583
          %v585 = vpop.f32.mrb[0].mxu0
          %v586 = vadd.f32 0.0, %v585
          %v587 = vpop.f32.mrb[0].mxu0
          %v588 = vadd.f32 0.0, %v587
          %v589 = vpop.f32.mrb[0].mxu0
          %v590 = vadd.f32 0.0, %v589
          %591 = vdwg.mxu0
          %592 = vmatprep.subr.bf16.mxu0 %v456
          %593 = vmatpush1.bf16.msra.mxu0 %v455
          %594 = vmatprep.subr.bf16.mxu0 %v462
          %595 = vmatpush1.bf16.msra.mxu0 %v461
          %596 = vmatprep.subr.bf16.mxu0 %v468
          %597 = vmatpush1.bf16.msra.mxu0 %v467
          %598 = vmatprep.subr.bf16.mxu0 %v474
          %599 = vmatpush1.bf16.msra.mxu0 %v473
          %600 = vmatprep.subr.bf16.mxu0 %v480
          %601 = vmatpush1.bf16.msra.mxu0 %v479
          %602 = vmatprep.subr.bf16.mxu0 %v486
          %603 = vmatpush1.bf16.msra.mxu0 %v485
          %604 = vmatprep.subr.bf16.mxu0 %v492
          %605 = vmatpush1.bf16.msra.mxu0 %v491
          %606 = vmatprep.subr.bf16.mxu0 %v498
          %607 = vmatpush1.bf16.msra.mxu0 %v497
          %608 = vmatprep.subr.bf16.mxu0 0
          %609 = vmatpush1.bf16.msra.mxu0 0
          %610 = vmatprep.subr.bf16.mxu0 0
          %611 = vmatpush1.bf16.msra.mxu0 0
          %612 = vmatprep.subr.bf16.mxu0 0
          %613 = vmatpush1.bf16.msra.mxu0 0
          %614 = vmatprep.subr.bf16.mxu0 0
          %615 = vmatpush1.bf16.msra.mxu0 0
          %616 = vmatprep.subr.bf16.mxu0 0
          %617 = vmatpush1.bf16.msra.mxu0 0
          %618 = vmatprep.subr.bf16.mxu0 0
          %619 = vmatpush1.bf16.msra.mxu0 0
          %620 = vmatprep.subr.bf16.mxu0 0
          %621 = vmatpush1.bf16.msra.mxu0 0
          %622 = vmatprep.subr.bf16.mxu0 0
          %623 = vmatpush1.bf16.msra.mxu0 0
          %624 = vmatprep.mubr.bf16.mxu0 0
          %625 = vmatmul.mubr.bf16.gmra.mrb[0].mxu0 %v307
          %v626 = vpop.f32.mrb[0].mxu0
          %v627 = vadd.f32 0.0, %v626
          %v628 = vpop.f32.mrb[0].mxu0
          %v629 = vadd.f32 0.0, %v628
          %v630 = vpop.f32.mrb[0].mxu0
          %v631 = vadd.f32 0.0, %v630
          %v632 = vpop.f32.mrb[0].mxu0
          %v633 = vadd.f32 0.0, %v632
          %634 = vdwg.mxu0
          %635 = vmatprep.subr.bf16.mxu0 %v458
          %636 = vmatpush1.bf16.msra.mxu0 %v457
          %637 = vmatprep.subr.bf16.mxu0 %v464
          %638 = vmatpush1.bf16.msra.mxu0 %v463
          %639 = vmatprep.subr.bf16.mxu0 %v470
          %640 = vmatpush1.bf16.msra.mxu0 %v469
          %641 = vmatprep.subr.bf16.mxu0 %v476
          %642 = vmatpush1.bf16.msra.mxu0 %v475
          %643 = vmatprep.subr.bf16.mxu0 %v482
          %644 = vmatpush1.bf16.msra.mxu0 %v481
          %645 = vmatprep.subr.bf16.mxu0 %v488
          %646 = vmatpush1.bf16.msra.mxu0 %v487
          %647 = vmatprep.subr.bf16.mxu0 %v494
          %648 = vmatpush1.bf16.msra.mxu0 %v493
          %649 = vmatprep.subr.bf16.mxu0 %v500
          %650 = vmatpush1.bf16.msra.mxu0 %v499
          %651 = vmatprep.subr.bf16.mxu0 0
          %652 = vmatpush1.bf16.msra.mxu0 0
          %653 = vmatprep.subr.bf16.mxu0 0
          %654 = vmatpush1.bf16.msra.mxu0 0
          %655 = vmatprep.subr.bf16.mxu0 0
          %656 = vmatpush1.bf16.msra.mxu0 0
          %657 = vmatprep.subr.bf16.mxu0 0
          %658 = vmatpush1.bf16.msra.mxu0 0
          %659 = vmatprep.subr.bf16.mxu0 0
          %660 = vmatpush1.bf16.msra.mxu0 0
          %661 = vmatprep.subr.bf16.mxu0 0
          %662 = vmatpush1.bf16.msra.mxu0 0
          %663 = vmatprep.subr.bf16.mxu0 0
          %664 = vmatpush1.bf16.msra.mxu0 0
          %665 = vmatprep.subr.bf16.mxu0 0
          %666 = vmatpush1.bf16.msra.mxu0 0
          %667 = vmatprep.mubr.bf16.mxu0 0
          %668 = vmatmul.mubr.bf16.gmra.mrb[0].mxu0 %v307
          %v669 = vpop.f32.mrb[0].mxu0
          %v670 = vadd.f32 0.0, %v669
          %v671 = vpop.f32.mrb[0].mxu0
          %v672 = vadd.f32 0.0, %v671
          %v673 = vpop.f32.mrb[0].mxu0
          %v674 = vadd.f32 0.0, %v673
          %v675 = vpop.f32.mrb[0].mxu0
          %v676 = vadd.f32 0.0, %v675
          %677 = vdwg.mxu0
          %v678 = vpack.c.bf16 %v588, %v584
          %v679 = vpack.c.bf16 %v590, %v586
          %v680 = vpack.c.bf16 %v631, %v627
          %v681 = vpack.c.bf16 %v633, %v629
          %v682 = vpack.c.bf16 %v674, %v670
          %v683 = vpack.c.bf16 %v676, %v672
          %684 = vst [vmem:[#allocation2] sm:$0xff] %v678
          %685 = vst [vmem:[#allocation2 + $0x8] sm:$0xff] %v679
          %686 = vst [vmem:[#allocation2 + $0x10] sm:$0xff] %v680
          %687 = vst [vmem:[#allocation2 + $0x18] sm:$0xff] %v681
          %688 = vst [vmem:[#allocation2 + $0x20] sm:$0xff] %v682
          %689 = vst [vmem:[#allocation2 + $0x28] sm:$0xff] %v683
        $region44: #{tpu_custom_call.1} parent=35 // pred_fallthru
          _
        %v690 = vld [vmem:[%s3] sm:$0x3]
        %v691 = vld [vmem:[#allocation2] sm:$0xff]
        %v692 = vld [vmem:[#allocation2 + $0x8] sm:$0xff]
        %v693 = vld [vmem:[%s245] sm:$0xf]
        %v694 = vld [vmem:[%s245 + $0x4] sm:$0xf]
        %v695 = vld [vmem:[%s245 + $0x8] sm:$0xf]
        %v696 = vld [vmem:[%s245 + $0xc] sm:$0xf]
        %v697 = vld [vmem:[#allocation2 + $0x10] sm:$0xff]
        %v698 = vld [vmem:[#allocation2 + $0x18] sm:$0xff]
        %s699 = scalar_lea.vmem %s245, 16
        %v700 = vld [vmem:[%s699] sm:$0xf]
        %v701 = vld [vmem:[%s699 + $0x4] sm:$0xf]
        %v702 = vld [vmem:[%s699 + $0x8] sm:$0xf]
        %v703 = vld [vmem:[%s699 + $0xc] sm:$0xf]
        %v708 = vunpack.c.l.b16 %v700
        %v709 = vunpack.c.l.b16 %v701
        %v710 = vunpack.c.l.b16 %v702
        %v711 = vunpack.c.l.b16 %v703
        %v712 = vpack.c.b16 %v709, %v708
        %v713 = vpack.c.b16 %v711, %v710
        %vm714 = vcmask 130048
        %v716 = vsel %vm714, %v712, 0
        %v719 = vsel %vm714, %v713, 0
        %721 = vmatprep.subr.bf16.mxu0 %v698
        %722 = vmatpush1.bf16.msra.mxu0 %v697
        %723 = vmatprep.subr.bf16.mxu0 0
        %724 = vmatpush1.bf16.msra.mxu0 0
        %725 = vmatprep.subr.bf16.mxu0 0
        %726 = vmatpush1.bf16.msra.mxu0 0
        %727 = vmatprep.subr.bf16.mxu0 0
        %728 = vmatpush1.bf16.msra.mxu0 0
        %729 = vmatprep.subr.bf16.mxu0 0
        %730 = vmatpush1.bf16.msra.mxu0 0
        %731 = vmatprep.subr.bf16.mxu0 0
        %732 = vmatpush1.bf16.msra.mxu0 0
        %733 = vmatprep.subr.bf16.mxu0 0
        %734 = vmatpush1.bf16.msra.mxu0 0
        %735 = vmatprep.subr.bf16.mxu0 0
        %736 = vmatpush1.bf16.msra.mxu0 0
        %737 = vmatprep.subr.bf16.mxu0 0
        %738 = vmatpush1.bf16.msra.mxu0 0
        %739 = vmatprep.subr.bf16.mxu0 0
        %740 = vmatpush1.bf16.msra.mxu0 0
        %741 = vmatprep.subr.bf16.mxu0 0
        %742 = vmatpush1.bf16.msra.mxu0 0
        %743 = vmatprep.subr.bf16.mxu0 0
        %744 = vmatpush1.bf16.msra.mxu0 0
        %745 = vmatprep.subr.bf16.mxu0 0
        %746 = vmatpush1.bf16.msra.mxu0 0
        %747 = vmatprep.subr.bf16.mxu0 0
        %748 = vmatpush1.bf16.msra.mxu0 0
        %749 = vmatprep.subr.bf16.mxu0 0
        %750 = vmatpush1.bf16.msra.mxu0 0
        %751 = vmatprep.subr.bf16.mxu0 0
        %752 = vmatpush1.bf16.msra.mxu0 0
        %753 = vmatprep.mubr.bf16.mxu0 0
        %754 = vmatmul.mubr.bf16.gmra.mrb[0].mxu0 %v716
        %v755 = vpop.f32.mrb[0].mxu0
        %v756 = vadd.f32 0.0, %v755
        %v757 = vpop.f32.mrb[0].mxu0
        %v758 = vadd.f32 0.0, %v757
        %v759 = vpop.f32.mrb[0].mxu0
        %v760 = vadd.f32 0.0, %v759
        %v761 = vpop.f32.mrb[0].mxu0
        %v762 = vadd.f32 0.0, %v761
        %763 = vmatprep.mubr.bf16.mxu0 0
        %764 = vmatmul.mubr.bf16.gmra.mrb[0].mxu0 %v719
        %v765 = vpop.f32.mrb[0].mxu0
        %v766 = vadd.f32 0.0, %v765
        %v767 = vpop.f32.mrb[0].mxu0
        %v768 = vadd.f32 0.0, %v767
        %v769 = vpop.f32.mrb[0].mxu0
        %v770 = vadd.f32 0.0, %v769
        %v771 = vpop.f32.mrb[0].mxu0
        %v772 = vadd.f32 0.0, %v771
        %773 = vdwg.mxu0
        %v778 = vunpack.c.l.b16 %v693
        %v779 = vunpack.c.l.b16 %v694
        %v780 = vunpack.c.l.b16 %v695
        %v781 = vunpack.c.l.b16 %v696
        %v782 = vpack.c.b16 %v779, %v778
        %v783 = vpack.c.b16 %v781, %v780
        %v785 = vsel %vm714, %v782, 0
        %v788 = vsel %vm714, %v783, 0
        %790 = vmatprep.subr.bf16.mxu0 %v692
        %791 = vmatpush1.bf16.msra.mxu0 %v691
        %792 = vmatprep.subr.bf16.mxu0 0
        %793 = vmatpush1.bf16.msra.mxu0 0
        %794 = vmatprep.subr.bf16.mxu0 0
        %795 = vmatpush1.bf16.msra.mxu0 0
        %796 = vmatprep.subr.bf16.mxu0 0
        %797 = vmatpush1.bf16.msra.mxu0 0
        %798 = vmatprep.subr.bf16.mxu0 0
        %799 = vmatpush1.bf16.msra.mxu0 0
        %800 = vmatprep.subr.bf16.mxu0 0
        %801 = vmatpush1.bf16.msra.mxu0 0
        %802 = vmatprep.subr.bf16.mxu0 0
        %803 = vmatpush1.bf16.msra.mxu0 0
        %804 = vmatprep.subr.bf16.mxu0 0
        %805 = vmatpush1.bf16.msra.mxu0 0
        %806 = vmatprep.subr.bf16.mxu0 0
        %807 = vmatpush1.bf16.msra.mxu0 0
        %808 = vmatprep.subr.bf16.mxu0 0
        %809 = vmatpush1.bf16.msra.mxu0 0
        %810 = vmatprep.subr.bf16.mxu0 0
        %811 = vmatpush1.bf16.msra.mxu0 0
        %812 = vmatprep.subr.bf16.mxu0 0
        %813 = vmatpush1.bf16.msra.mxu0 0
        %814 = vmatprep.subr.bf16.mxu0 0
        %815 = vmatpush1.bf16.msra.mxu0 0
        %816 = vmatprep.subr.bf16.mxu0 0
        %817 = vmatpush1.bf16.msra.mxu0 0
        %818 = vmatprep.subr.bf16.mxu0 0
        %819 = vmatpush1.bf16.msra.mxu0 0
        %820 = vmatprep.subr.bf16.mxu0 0
        %821 = vmatpush1.bf16.msra.mxu0 0
        %822 = vmatprep.mubr.bf16.mxu0 0
        %823 = vmatmul.mubr.bf16.gmra.mrb[0].mxu0 %v785
        %v824 = vpop.f32.mrb[0].mxu0
        %v825 = vadd.f32 %v756, %v824
        %v826 = vpop.f32.mrb[0].mxu0
        %v827 = vadd.f32 %v758, %v826
        %v828 = vpop.f32.mrb[0].mxu0
        %v829 = vadd.f32 %v760, %v828
        %v830 = vpop.f32.mrb[0].mxu0
        %v831 = vadd.f32 %v762, %v830
        %832 = vmatprep.mubr.bf16.mxu0 0
        %833 = vmatmul.mubr.bf16.gmra.mrb[0].mxu0 %v788
        %v834 = vpop.f32.mrb[0].mxu0
        %v835 = vadd.f32 %v766, %v834
        %v836 = vpop.f32.mrb[0].mxu0
        %v837 = vadd.f32 %v768, %v836
        %v838 = vpop.f32.mrb[0].mxu0
        %v839 = vadd.f32 %v770, %v838
        %v840 = vpop.f32.mrb[0].mxu0
        %v841 = vadd.f32 %v772, %v840
        %842 = vdwg.mxu0
        %v843 = vld [vmem:[#allocation2 + $0x20] sm:$0xff]
        %v844 = vld [vmem:[#allocation2 + $0x28] sm:$0xff]
        %s845 = scalar_lea.vmem %s245, 32
        %v846 = vld [vmem:[%s845] sm:$0xf]
        %v847 = vld [vmem:[%s845 + $0x4] sm:$0xf]
        %v848 = vld [vmem:[%s845 + $0x8] sm:$0xf]
        %v849 = vld [vmem:[%s845 + $0xc] sm:$0xf]
        %v854 = vunpack.c.l.b16 %v846
        %v855 = vunpack.c.l.b16 %v847
        %v856 = vunpack.c.l.b16 %v848
        %v857 = vunpack.c.l.b16 %v849
        %v858 = vpack.c.b16 %v855, %v854
        %v859 = vpack.c.b16 %v857, %v856
        %v861 = vsel %vm714, %v858, 0
        %v864 = vsel %vm714, %v859, 0
        %866 = vmatprep.subr.bf16.mxu0 %v844
        %867 = vmatpush1.bf16.msra.mxu0 %v843
        %868 = vmatprep.subr.bf16.mxu0 0
        %869 = vmatpush1.bf16.msra.mxu0 0
        %870 = vmatprep.subr.bf16.mxu0 0
        %871 = vmatpush1.bf16.msra.mxu0 0
        %872 = vmatprep.subr.bf16.mxu0 0
        %873 = vmatpush1.bf16.msra.mxu0 0
        %874 = vmatprep.subr.bf16.mxu0 0
        %875 = vmatpush1.bf16.msra.mxu0 0
        %876 = vmatprep.subr.bf16.mxu0 0
        %877 = vmatpush1.bf16.msra.mxu0 0
        %878 = vmatprep.subr.bf16.mxu0 0
        %879 = vmatpush1.bf16.msra.mxu0 0
        %880 = vmatprep.subr.bf16.mxu0 0
        %881 = vmatpush1.bf16.msra.mxu0 0
        %882 = vmatprep.subr.bf16.mxu0 0
        %883 = vmatpush1.bf16.msra.mxu0 0
        %884 = vmatprep.subr.bf16.mxu0 0
        %885 = vmatpush1.bf16.msra.mxu0 0
        %886 = vmatprep.subr.bf16.mxu0 0
        %887 = vmatpush1.bf16.msra.mxu0 0
        %888 = vmatprep.subr.bf16.mxu0 0
        %889 = vmatpush1.bf16.msra.mxu0 0
        %890 = vmatprep.subr.bf16.mxu0 0
        %891 = vmatpush1.bf16.msra.mxu0 0
        %892 = vmatprep.subr.bf16.mxu0 0
        %893 = vmatpush1.bf16.msra.mxu0 0
        %894 = vmatprep.subr.bf16.mxu0 0
        %895 = vmatpush1.bf16.msra.mxu0 0
        %896 = vmatprep.subr.bf16.mxu0 0
        %897 = vmatpush1.bf16.msra.mxu0 0
        %898 = vmatprep.mubr.bf16.mxu0 0
        %899 = vmatmul.mubr.bf16.gmra.mrb[0].mxu0 %v861
        %v900 = vpop.f32.mrb[0].mxu0
        %v901 = vadd.f32 0.0, %v900
        %v902 = vpop.f32.mrb[0].mxu0
        %v903 = vadd.f32 0.0, %v902
        %v904 = vpop.f32.mrb[0].mxu0
        %v905 = vadd.f32 0.0, %v904
        %v906 = vpop.f32.mrb[0].mxu0
        %v907 = vadd.f32 0.0, %v906
        %908 = vmatprep.mubr.bf16.mxu0 0
        %909 = vmatmul.mubr.bf16.gmra.mrb[0].mxu0 %v864
        %v910 = vpop.f32.mrb[0].mxu0
        %v911 = vadd.f32 0.0, %v910
        %v912 = vpop.f32.mrb[0].mxu0
        %v913 = vadd.f32 0.0, %v912
        %v914 = vpop.f32.mrb[0].mxu0
        %v915 = vadd.f32 0.0, %v914
        %v916 = vpop.f32.mrb[0].mxu0
        %v917 = vadd.f32 0.0, %v916
        %918 = vdwg.mxu0
        %v919 = vadd.f32 %v825, %v901
        %v920 = vadd.f32 %v827, %v903
        %v921 = vadd.f32 %v829, %v905
        %v922 = vadd.f32 %v831, %v907
        %v923 = vadd.f32 %v835, %v911
        %v924 = vadd.f32 %v837, %v913
        %v925 = vadd.f32 %v839, %v915
        %v926 = vadd.f32 %v841, %v917
        %v928 = vlaneseq
        %v929 = vshrl.u32 %v928, 7
        %v930 = vsub.s32 0, %v929
        %v931 = vrot.slane %v690, %v930
        %v932 = vlaneseq
        %v933 = vshrl.u32 %v932, 7
        %v934 = vsub.s32 1, %v933
        %v935 = vrot.slane %v690, %v934
        %v938 = vadd.f32 %v919, %v931
        %v939 = vadd.f32 %v920, %v935
        %v940 = vadd.f32 %v921, %v931
        %v941 = vadd.f32 %v922, %v935
        %v942 = vadd.f32 %v923, %v931
        %v943 = vadd.f32 %v924, %v935
        %v944 = vadd.f32 %v925, %v931
        %v945 = vadd.f32 %v926, %v935
        %946 = vst [vmem:[%s235] sm:$0xff] %v938
        %947 = vst [vmem:[%s235 + $0x8] sm:$0xff] %v939
        %948 = vst [vmem:[%s235 + $0x10] sm:$0xff] %v940
        %949 = vst [vmem:[%s235 + $0x18] sm:$0xff] %v941
        %950 = vst [vmem:[%s235 + $0x20] sm:$0xff] %v942
        %951 = vst [vmem:[%s235 + $0x28] sm:$0xff] %v943
        %952 = vst [vmem:[%s235 + $0x30] sm:$0xff] %v944
        %953 = vst [vmem:[%s235 + $0x38] sm:$0xff] %v945
        %s954 = sand.u32 %s135, 1
        %s955 = scalar_lea.sflag [#allocation5], %s954
        %s956 = sand.u32 %s135, 1
        %s957 = smul.addr %s956, 64
        %s958 = scalar_lea.vmem [#allocation6], %s957
        // Predicated region
        $region45: #{tpu_custom_call.1} parent=35 // pred_check
          %p959 = pneg %p145
        $region46: #{tpu_custom_call.1} parent=35 // pred_check_branch
          %961 = sbr.rel (%p959) target = $region48
        $region47: #{tpu_custom_call.1} parent=35 // pred_region
          %s962 = smul.u32 4, %s24
          %s964 = ssub.s32 1024, 1024
          %965 = vsyncadd %s955, %s964
          %s966 = smul.addr %s962, 2
          %s967 = smul.addr %s23, 8
          %s968 = sadd.s32 %s966, %s967
          %s969 = smul.addr %s968, 128
          %s970 = scalar_lea.hbm %s4, %s969
          %s971 = sshll.u32 %s958, 4
          %s972 = int_to_ptr.vmem [resolvable:$true] %s971
          %977 = dma.vmem_to_hbm [thread:$0]  %s972, 1024, %s970, %s955, 256, 256, 16
        $region48: #{tpu_custom_call.1} parent=35 // pred_fallthru
          _
      $region36: #{tpu_custom_call.1} parent=5 // pred_fallthru
        _
      %p978 = scmp.le.s32.totalorder 2, %s14
      // Predicated region
      $region49: #{tpu_custom_call.1} parent=5 // pred_check
        %p979 = pneg %p978
      $region50: #{tpu_custom_call.1} parent=5 // pred_check_branch
        %981 = sbr.rel (%p979) target = $region52
      $region51: #{tpu_custom_call.1} parent=5 // pred_region
        %s982 = ssub.s32 %s14, 2
        // Predicated region
        $region53: #{tpu_custom_call.1} parent=51 // pred_check
          %p983 = pneg %p151
        $region54: #{tpu_custom_call.1} parent=51 // pred_check_branch
          %985 = sbr.rel (%p983) target = $region56
        $region55: #{tpu_custom_call.1} parent=51 // pred_region
          %s986 = sand.u32 %s136, 1
          %s987 = scalar_lea.sflag [#allocation5], %s986
          %s988 = sand.u32 %s136, 1
          %s989 = smul.addr %s988, 64
          %s990 = scalar_lea.vmem [#allocation6], %s989
          %991 = dma.done %s987, 1024
        $region56: #{tpu_custom_call.1} parent=51 // pred_fallthru
          _
      $region52: #{tpu_custom_call.1} parent=5 // pred_fallthru
        _
    $region6: #{tpu_custom_call.1} parent=1 // loop_footer
      %s18 = sadd.s32 1, %s14
    $region7: #{tpu_custom_call.1} parent=1 // loop_footer_branch
      %13 = sbr.rel target = $region3
    $region8: #{tpu_custom_call.1} parent=1 // loop_exit
      _
    %992 = vsyncpa [#allocation4], 1
    %s993 = scalar_lea.sflag [#allocation4], 1
    %994 = vsyncpa %s993, 1
    %995 = vsyncpa [#allocation5], 1
    %s996 = scalar_lea.sflag [#allocation5], 1
    %997 = vsyncpa %s996, 1

</llo_original>
